<compile_context>
chip_gen: v7x
topology: tpu7x:2x2x1
jax: 0.10.0
libtpu: 0.0.40
codegen_flags: <defaults>
</compile_context>

<pallas_src>
import functools

import jax
import jax.numpy as jnp
from jax import lax
from jax.experimental import pallas as pl
from jax.experimental.pallas import tpu as pltpu

EPSILON = 1e-07
N_CLASSES = 14


def _round_up(x, m):
    return ((x + m - 1) // m) * m


def _f1_partials_kernel(y_pred_ref, y_true_ref, tp_ref, colsum_ref, cnt_ref,
                        *, total_n, tile_n, tiles_per_split, needs_mask):
    # Zero this split's accumulators at the start of its inner (reduction) loop.
    @pl.when(pl.program_id(1) == 0)
    def _():
        tp_ref[...] = jnp.zeros_like(tp_ref)
        colsum_ref[...] = jnp.zeros_like(colsum_ref)
        cnt_ref[...] = jnp.zeros_like(cnt_ref)

    logits = y_pred_ref[...].astype(jnp.float32)   # (tile_n, C)
    labels = y_true_ref[...]                        # (tile_n, 1) int32
    tn, c = logits.shape

    # Softmax over the class axis (dim=1).
    m = jnp.max(logits, axis=1, keepdims=True)
    e = jnp.exp(logits - m)
    p = e / jnp.sum(e, axis=1, keepdims=True)       # (tile_n, C)

    # One-hot membership mask (no materialized (1 - onehot) passes needed).
    class_ids = lax.broadcasted_iota(jnp.int32, (tn, c), 1)
    eq = class_ids == labels                        # (tile_n, C) bool

    if needs_mask:
        # Mask padded rows of the ragged last tile / phantom tiles of the split.
        tile_idx = pl.program_id(0) * tiles_per_split + pl.program_id(1)
        row0 = tile_idx * tile_n
        row_id = lax.broadcasted_iota(jnp.int32, (tn, 1), 0)
        valid = (row0 + row_id) < total_n           # (tile_n, 1) bool
        p = jnp.where(valid, p, 0.0)
        eq = jnp.logical_and(eq, valid)

    onehot = eq.astype(jnp.float32)
    tp_t = jnp.sum(jnp.where(eq, p, 0.0), axis=0, keepdims=True)   # (1, C)
    colsum_t = jnp.sum(p, axis=0, keepdims=True)                   # (1, C)
    cnt_t = jnp.sum(onehot, axis=0, keepdims=True)                 # (1, C)

    tp_ref[...] += tp_t[None]          # (1, 1, C)
    colsum_ref[...] += colsum_t[None]
    cnt_ref[...] += cnt_t[None]


def f1_loss(y_pred, y_true, n_classes=N_CLASSES, epsilon=EPSILON,
            tile_n=32768, num_splits=2):
    """Soft-F1 loss. y_pred: [N, n_classes] f32 logits; y_true: [N] int labels."""
    assert y_pred.ndim == 2 and y_pred.shape[1] == n_classes
    n = y_pred.shape[0]
    c = n_classes
    y_pred = y_pred.astype(jnp.float32)
    y_true_2d = y_true.astype(jnp.int32).reshape(n, 1)

    # Tile sizing: keep blocks sublane-aligned and no bigger than the batch.
    tile_n = min(tile_n, _round_up(n, 8))
    n_tiles = pl.cdiv(n, tile_n)
    num_splits = max(1, min(num_splits, n_tiles))       # 2-way core split (v7x)
    tiles_per_split = pl.cdiv(n_tiles, num_splits)
    needs_mask = (num_splits * tiles_per_split * tile_n) != n

    def tile_map(s, i):
        # Clamp phantom tiles past the end of the batch; they are masked to
        # zero inside the kernel, so re-reading the last block is harmless.
        return (jnp.minimum(s * tiles_per_split + i, n_tiles - 1), 0)

    kernel = functools.partial(
        _f1_partials_kernel,
        total_n=n, tile_n=tile_n, tiles_per_split=tiles_per_split,
        needs_mask=needs_mask)

    part_shape = jax.ShapeDtypeStruct((num_splits, 1, c), jnp.float32)
    part_spec = pl.BlockSpec((1, 1, c), lambda s, i: (s, 0, 0))

    tp_p, colsum_p, cnt_p = pl.pallas_call(
        kernel,
        grid=(num_splits, tiles_per_split),
        in_specs=[
            pl.BlockSpec((tile_n, c), tile_map),
            pl.BlockSpec((tile_n, 1), tile_map),
        ],
        out_specs=(part_spec, part_spec, part_spec),
        out_shape=(part_shape, part_shape, part_shape),
        compiler_params=pltpu.CompilerParams(
            dimension_semantics=("parallel", "arbitrary")),
    )(y_pred, y_true_2d)

    # Combine the per-split partials and finish the 14-element math in JAX.
    tp = jnp.sum(tp_p, axis=(0, 1))            # (C,)
    colsum = jnp.sum(colsum_p, axis=(0, 1))    # (C,)  = sum_n softmax(y_pred)
    cnt = jnp.sum(cnt_p, axis=(0, 1))          # (C,)  = count(labels == c)
    fp = colsum - tp                           # sum((1 - y_true) * y_pred)
    fn = cnt - tp                              # sum(y_true * (1 - y_pred))

    precision = tp / (tp + fp + epsilon)
    recall = tp / (tp + fn + epsilon)
    f1 = 2.0 * (precision * recall) / (precision + recall + epsilon)
    f1 = jnp.clip(f1, epsilon, 1.0 - epsilon)
    return 1.0 / (jnp.mean(f1) + epsilon)


def _ref_f1_loss(y_pred, y_true, n_classes=N_CLASSES, epsilon=EPSILON):
    y_t = jax.nn.one_hot(y_true, n_classes, dtype=jnp.float32)
    y_p = jax.nn.softmax(y_pred.astype(jnp.float32), axis=1)
    tp = jnp.sum(y_t * y_p, axis=0)
    fp = jnp.sum((1 - y_t) * y_p, axis=0)
    fn = jnp.sum(y_t * (1 - y_p), axis=0)
    prec = tp / (tp + fp + epsilon)
    rec = tp / (tp + fn + epsilon)
    f1 = 2 * prec * rec / (prec + rec + epsilon)
    f1 = jnp.clip(f1, epsilon, 1 - epsilon)
    return 1.0 / (jnp.mean(f1) + epsilon)


if __name__ == "__main__":
    key = jax.random.PRNGKey(0)
    k_pred, k_true, k_pred2, k_true2 = jax.random.split(key, 4)

    # Small single-tile case.
    batch = 8
    y_pred = jax.random.normal(k_pred, (batch, N_CLASSES), dtype=jnp.float32)
    y_true = jax.random.randint(k_true, (batch,), 0, N_CLASSES, dtype=jnp.int32)
    loss = jax.block_until_ready(f1_loss(y_pred, y_true))
    ref_loss = _ref_f1_loss(y_pred, y_true)
    assert jnp.allclose(loss, ref_loss, rtol=1e-5, atol=1e-5), (loss, ref_loss)

    # Ragged multi-tile case exercising the grid, the 2-way split and masking.
    batch2 = 100
    y_pred2 = jax.random.normal(k_pred2, (batch2, N_CLASSES), dtype=jnp.float32)
    y_true2 = jax.random.randint(k_true2, (batch2,), 0, N_CLASSES, dtype=jnp.int32)
    loss2 = jax.block_until_ready(
        f1_loss(y_pred2, y_true2, tile_n=32, num_splits=2))
    ref_loss2 = _ref_f1_loss(y_pred2, y_true2)
    assert jnp.allclose(loss2, ref_loss2, rtol=1e-5, atol=1e-5), (loss2, ref_loss2)

    print("KERNEL_OK")
</pallas_src>

<mosaic_0001>
module attributes {stable_mosaic.version = 11 : i64} {
  func.func @_f1_partials_kernel(%arg0: i32, %arg1: i32, %arg2: memref<8x14xf32, #tpu.memory_space<vmem>>, %arg3: memref<8x1xi32, #tpu.memory_space<vmem>>, %arg4: memref<1x1x14xf32, #tpu.memory_space<vmem>>, %arg5: memref<1x1x14xf32, #tpu.memory_space<vmem>>, %arg6: memref<1x1x14xf32, #tpu.memory_space<vmem>>) attributes {dimension_semantics = [#tpu.dimension_semantics<parallel>, #tpu.dimension_semantics<arbitrary>], iteration_bounds = array<i64: 1, 1>, scalar_prefetch = 0 : i64, scratch_operands = 0 : i64, tpu.core_type = #tpu.core_type<tc>, window_params = [{transform_indices = @transform_0, window_bounds = array<i64: 8, 14>}, {transform_indices = @transform_1, window_bounds = array<i64: 8, 1>}, {transform_indices = @transform_2, window_bounds = array<i64: 1, 1, 14>}, {transform_indices = @transform_3, window_bounds = array<i64: 1, 1, 14>}, {transform_indices = @transform_4, window_bounds = array<i64: 1, 1, 14>}]} {
    %c0_i32 = arith.constant 0 : i32
    %0 = arith.cmpi eq, %arg1, %c0_i32 : i32
    %1 = arith.extui %0 : i1 to i32
    %c0_i32_0 = arith.constant 0 : i32
    %2 = arith.cmpi ne, %1, %c0_i32_0 : i32
    scf.if %2 {
      %cst_27 = arith.constant 0.000000e+00 : f32
      %39 = vector.broadcast %cst_27 : f32 to vector<1x1x14xf32>
      %c0_28 = arith.constant 0 : index
      %c0_29 = arith.constant 0 : index
      %c0_30 = arith.constant 0 : index
      %40 = vector.load %arg4[%c0_28, %c0_29, %c0_30] : memref<1x1x14xf32, #tpu.memory_space<vmem>>, vector<1x1x14xf32>
      tpu.vector_store %arg4[%c0_28, %c0_29, %c0_30], %39 {strides = array<i32>} : memref<1x1x14xf32, #tpu.memory_space<vmem>>, vector<1x1x14xf32>,
      %cst_31 = arith.constant 0.000000e+00 : f32
      %41 = vector.broadcast %cst_31 : f32 to vector<1x1x14xf32>
      %c0_32 = arith.constant 0 : index
      %c0_33 = arith.constant 0 : index
      %c0_34 = arith.constant 0 : index
      %42 = vector.load %arg5[%c0_32, %c0_33, %c0_34] : memref<1x1x14xf32, #tpu.memory_space<vmem>>, vector<1x1x14xf32>
      tpu.vector_store %arg5[%c0_32, %c0_33, %c0_34], %41 {strides = array<i32>} : memref<1x1x14xf32, #tpu.memory_space<vmem>>, vector<1x1x14xf32>,
      %cst_35 = arith.constant 0.000000e+00 : f32
      %43 = vector.broadcast %cst_35 : f32 to vector<1x1x14xf32>
      %c0_36 = arith.constant 0 : index
      %c0_37 = arith.constant 0 : index
      %c0_38 = arith.constant 0 : index
      %44 = vector.load %arg6[%c0_36, %c0_37, %c0_38] : memref<1x1x14xf32, #tpu.memory_space<vmem>>, vector<1x1x14xf32>
      tpu.vector_store %arg6[%c0_36, %c0_37, %c0_38], %43 {strides = array<i32>} : memref<1x1x14xf32, #tpu.memory_space<vmem>>, vector<1x1x14xf32>,
    } else {
    }
    %c0 = arith.constant 0 : index
    %c0_1 = arith.constant 0 : index
    %3 = vector.load %arg2[%c0, %c0_1] : memref<8x14xf32, #tpu.memory_space<vmem>>, vector<8x14xf32>
    %c0_2 = arith.constant 0 : index
    %c0_3 = arith.constant 0 : index
    %4 = vector.load %arg3[%c0_2, %c0_3] : memref<8x1xi32, #tpu.memory_space<vmem>>, vector<8x1xi32>
    %cst = arith.constant dense<0xFF800000> : vector<8xf32>
    %5 = vector.multi_reduction <maximumf>, %3, %cst [1] : vector<8x14xf32> to vector<8xf32>
    %6 = vector.shape_cast %5 : vector<8xf32> to vector<8x1xf32>
    %7 = vector.broadcast %6 : vector<8x1xf32> to vector<8x14xf32>
    %8 = arith.subf %3, %7 : vector<8x14xf32>
    %9 = math.exp %8 : vector<8x14xf32>
    %cst_4 = arith.constant dense<0.000000e+00> : vector<8xf32>
    %10 = vector.multi_reduction <add>, %9, %cst_4 [1] : vector<8x14xf32> to vector<8xf32>
    %11 = vector.shape_cast %10 : vector<8xf32> to vector<8x1xf32>
    %12 = vector.broadcast %11 : vector<8x1xf32> to vector<8x14xf32>
    %13 = arith.divf %9, %12 : vector<8x14xf32>
    %14 = tpu.iota {dimensions = array<i32: 1>} : vector<8x14xi32>
    %15 = vector.broadcast %4 : vector<8x1xi32> to vector<8x14xi32>
    %16 = arith.cmpi eq, %14, %15 : vector<8x14xi32>
    %17 = arith.extui %16 : vector<8x14xi1> to vector<8x14xi32>
    %18 = arith.sitofp %17 : vector<8x14xi32> to vector<8x14xf32>
    %cst_5 = arith.constant 0.000000e+00 : f32
    %19 = vector.broadcast %cst_5 : f32 to vector<8x14xf32>
    %20 = arith.select %16, %13, %19 : vector<8x14xi1>, vector<8x14xf32>
    %cst_6 = arith.constant dense<0.000000e+00> : vector<14xf32>
    %21 = vector.multi_reduction <add>, %20, %cst_6 [0] : vector<8x14xf32> to vector<14xf32>
    %22 = vector.shape_cast %21 : vector<14xf32> to vector<1x14xf32>
    %cst_7 = arith.constant dense<0.000000e+00> : vector<14xf32>
    %23 = vector.multi_reduction <add>, %13, %cst_7 [0] : vector<8x14xf32> to vector<14xf32>
    %24 = vector.shape_cast %23 : vector<14xf32> to vector<1x14xf32>
    %cst_8 = arith.constant dense<0.000000e+00> : vector<14xf32>
    %25 = vector.multi_reduction <add>, %18, %cst_8 [0] : vector<8x14xf32> to vector<14xf32>
    %26 = vector.shape_cast %25 : vector<14xf32> to vector<1x14xf32>
    %c0_9 = arith.constant 0 : index
    %c0_10 = arith.constant 0 : index
    %c0_11 = arith.constant 0 : index
    %27 = vector.load %arg4[%c0_9, %c0_10, %c0_11] : memref<1x1x14xf32, #tpu.memory_space<vmem>>, vector<1x1x14xf32>
    %28 = vector.shape_cast %22 : vector<1x14xf32> to vector<1x1x14xf32>
    %29 = arith.addf %27, %28 : vector<1x1x14xf32>
    %c0_12 = arith.constant 0 : index
    %c0_13 = arith.constant 0 : index
    %c0_14 = arith.constant 0 : index
    %30 = vector.load %arg4[%c0_12, %c0_13, %c0_14] : memref<1x1x14xf32, #tpu.memory_space<vmem>>, vector<1x1x14xf32>
    tpu.vector_store %arg4[%c0_12, %c0_13, %c0_14], %29 {strides = array<i32>} : memref<1x1x14xf32, #tpu.memory_space<vmem>>, vector<1x1x14xf32>,
    %c0_15 = arith.constant 0 : index
    %c0_16 = arith.constant 0 : index
    %c0_17 = arith.constant 0 : index
    %31 = vector.load %arg5[%c0_15, %c0_16, %c0_17] : memref<1x1x14xf32, #tpu.memory_space<vmem>>, vector<1x1x14xf32>
    %32 = vector.shape_cast %24 : vector<1x14xf32> to vector<1x1x14xf32>
    %33 = arith.addf %31, %32 : vector<1x1x14xf32>
    %c0_18 = arith.constant 0 : index
    %c0_19 = arith.constant 0 : index
    %c0_20 = arith.constant 0 : index
    %34 = vector.load %arg5[%c0_18, %c0_19, %c0_20] : memref<1x1x14xf32, #tpu.memory_space<vmem>>, vector<1x1x14xf32>
    tpu.vector_store %arg5[%c0_18, %c0_19, %c0_20], %33 {strides = array<i32>} : memref<1x1x14xf32, #tpu.memory_space<vmem>>, vector<1x1x14xf32>,
    %c0_21 = arith.constant 0 : index
    %c0_22 = arith.constant 0 : index
    %c0_23 = arith.constant 0 : index
    %35 = vector.load %arg6[%c0_21, %c0_22, %c0_23] : memref<1x1x14xf32, #tpu.memory_space<vmem>>, vector<1x1x14xf32>
    %36 = vector.shape_cast %26 : vector<1x14xf32> to vector<1x1x14xf32>
    %37 = arith.addf %35, %36 : vector<1x1x14xf32>
    %c0_24 = arith.constant 0 : index
    %c0_25 = arith.constant 0 : index
    %c0_26 = arith.constant 0 : index
    %38 = vector.load %arg6[%c0_24, %c0_25, %c0_26] : memref<1x1x14xf32, #tpu.memory_space<vmem>>, vector<1x1x14xf32>
    tpu.vector_store %arg6[%c0_24, %c0_25, %c0_26], %37 {strides = array<i32>} : memref<1x1x14xf32, #tpu.memory_space<vmem>>, vector<1x1x14xf32>,
    return
  }
  func.func @transform_0(%arg0: i32, %arg1: i32) -> (i32, i32) {
    %c1_i32 = arith.constant 1 : i32
    %0 = arith.muli %arg0, %c1_i32 : i32
    %1 = arith.addi %0, %arg1 : i32
    %c0_i32 = arith.constant 0 : i32
    %2 = arith.minsi %1, %c0_i32 : i32
    %c0_i32_0 = arith.constant 0 : i32
    %c0_i32_1 = arith.constant 0 : i32
    return %2, %c0_i32_0 : i32, i32
  }
  func.func @transform_1(%arg0: i32, %arg1: i32) -> (i32, i32) {
    %c1_i32 = arith.constant 1 : i32
    %0 = arith.muli %arg0, %c1_i32 : i32
    %1 = arith.addi %0, %arg1 : i32
    %c0_i32 = arith.constant 0 : i32
    %2 = arith.minsi %1, %c0_i32 : i32
    %c0_i32_0 = arith.constant 0 : i32
    %c0_i32_1 = arith.constant 0 : i32
    return %2, %c0_i32_0 : i32, i32
  }
  func.func @transform_2(%arg0: i32, %arg1: i32) -> (i32, i32, i32) {
    %c0_i32 = arith.constant 0 : i32
    %c0_i32_0 = arith.constant 0 : i32
    %c0_i32_1 = arith.constant 0 : i32
    return %arg0, %c0_i32, %c0_i32_0 : i32, i32, i32
  }
  func.func @transform_3(%arg0: i32, %arg1: i32) -> (i32, i32, i32) {
    %c0_i32 = arith.constant 0 : i32
    %c0_i32_0 = arith.constant 0 : i32
    %c0_i32_1 = arith.constant 0 : i32
    return %arg0, %c0_i32, %c0_i32_0 : i32, i32, i32
  }
  func.func @transform_4(%arg0: i32, %arg1: i32) -> (i32, i32, i32) {
    %c0_i32 = arith.constant 0 : i32
    %c0_i32_0 = arith.constant 0 : i32
    %c0_i32_1 = arith.constant 0 : i32
    return %arg0, %c0_i32, %c0_i32_0 : i32, i32, i32
  }
}

</mosaic_0001>

<llo_original>
// kernel: tpu_custom_call.1
$region0: #{tpu_custom_call.1}
  #allocation0 [shape = 'u32[]', space=smem, size = 0x4, offset = 0x4, fixed_abs, tag = 'smem constant byte address 0x4 - core index']
  #allocation1 [shape = 'u32[144,128]{1,0:T(1,128)}', space=vmem, size = 0x12000, scoped, tag = 'internal scratch']
  %s0 = inlined_call_operand.vmem [shape: f32[8,14], index: 0, kind: input, shape index: {}]
  %s1 = inlined_call_operand.vmem [shape: s32[8,1], index: 1, kind: input, shape index: {}]
  %s2 = inlined_call_operand.hbm [shape: f32[1,1,14], index: 2, kind: output, shape index: {0}]
  %s3 = inlined_call_operand.hbm [shape: f32[1,1,14], index: 3, kind: output, shape index: {1}]
  %s4 = inlined_call_operand.hbm [shape: f32[1,1,14], index: 4, kind: output, shape index: {2}]
  %5 = xla_tuple %s2, %s3, %s4
  %s6 = sld [smem:[#allocation0]]
  $region38: #{tpu_custom_call.1} parent=0
    _
  %s8 = ssub.s32 1, %s6
  %s9 = scalar_select 0, %s8, %s6
  $region1: #{tpu_custom_call.1} parent=0
    #allocation2 [shape = 'u8[512]{0}', space=vmem, size = 0x400, scoped, tag = 'output window, operand 0, single buffered']
    #allocation3 [shape = 's32[1]{0}', space=sflag, size = 0x4, scoped, tag = 'scoped memory for tpu_custom_call.1']
    #allocation4 [shape = 'u8[512]{0}', space=vmem, size = 0x400, scoped, tag = 'output window, operand 1, single buffered']
    #allocation5 [shape = 's32[1]{0}', space=sflag, size = 0x4, scoped, tag = 'scoped memory for tpu_custom_call.1']
    #allocation6 [shape = 'u8[512]{0}', space=vmem, size = 0x400, scoped, tag = 'output window, operand 2, single buffered']
    %10 = vsyncpa [#allocation3], 0
    %11 = vsyncpa [#allocation5], 0
    // Predicated region
    $region2: #{tpu_custom_call.1} parent=1 // pred_check
      _
    $region3: #{tpu_custom_call.1} parent=1 // pred_check_branch
      %13 = sbr.rel (0) target = $region5
    $region4: #{tpu_custom_call.1} parent=1 // pred_region
      %s14 = sadd.s32 0, 0
      %p15 = scmp.lt.s32.totalorder %s14, 0
      %s16 = scalar_select %p15, %s14, 0
      %p17 = scmp.lt.s32.totalorder %s16, 0
      %s18 = scalar_select %p17, %s16, 0
      %s19 = smul.addr %s18, 8
      %s20 = scalar_lea.vmem %s0, %s19
      %s21 = sadd.s32 0, 0
      %p22 = scmp.lt.s32.totalorder %s21, 0
      %s23 = scalar_select %p22, %s21, 0
    $region5: #{tpu_custom_call.1} parent=1 // pred_fallthru
      _
    // Predicated region
    $region6: #{tpu_custom_call.1} parent=1 // pred_check
      _
    $region7: #{tpu_custom_call.1} parent=1 // pred_check_branch
      %25 = sbr.rel (0) target = $region9
    $region8: #{tpu_custom_call.1} parent=1 // pred_region
      %s26 = sadd.s32 0, 0
      %p27 = scmp.lt.s32.totalorder %s26, 0
      %s28 = scalar_select %p27, %s26, 0
      %p29 = scmp.lt.s32.totalorder %s28, 0
      %s30 = scalar_select %p29, %s28, 0
      %s31 = smul.addr %s30, 8
      %s32 = scalar_lea.vmem %s1, %s31
      %s33 = sadd.s32 0, 0
      %p34 = scmp.lt.s32.totalorder %s33, 0
      %s35 = scalar_select %p34, %s33, 0
    $region9: #{tpu_custom_call.1} parent=1 // pred_fallthru
      _
    %s36 = sadd.s32 0, 0
    %p37 = scmp.lt.s32.totalorder %s36, 0
    %s38 = scalar_select %p37, %s36, 0
    %p39 = scmp.lt.s32.totalorder %s38, 0
    %s40 = scalar_select %p39, %s38, 0
    %s41 = smul.addr %s40, 8
    %s42 = scalar_lea.vmem %s0, %s41
    %s43 = sadd.s32 0, 0
    %p44 = scmp.lt.s32.totalorder %s43, 0
    %s45 = scalar_select %p44, %s43, 0
    %p46 = scmp.lt.s32.totalorder %s45, 0
    %s47 = scalar_select %p46, %s45, 0
    %s48 = smul.addr %s47, 8
    %s49 = scalar_lea.vmem %s1, %s48
    %s50 = sadd.s32 0, 0
    %p51 = scmp.lt.s32.totalorder %s50, 0
    %s52 = scalar_select %p51, %s50, 0
    %p53 = scmp.lt.s32.totalorder %s52, 0
    %s54 = scalar_select %p53, %s52, 0
    %s55 = smul.addr %s54, 8
    %s56 = scalar_lea.vmem %s0, %s55
    %s57 = sadd.s32 0, 0
    %p58 = scmp.lt.s32.totalorder %s57, 0
    %s59 = scalar_select %p58, %s57, 0
    %s60 = sadd.s32 0, 0
    %p61 = scmp.lt.s32.totalorder %s60, 0
    %s62 = scalar_select %p61, %s60, 0
    %p63 = scmp.lt.s32.totalorder %s62, 0
    %s64 = scalar_select %p63, %s62, 0
    %s65 = smul.addr %s64, 8
    %s66 = scalar_lea.vmem %s1, %s65
    %s67 = sadd.s32 0, 0
    %p68 = scmp.lt.s32.totalorder %s67, 0
    %s69 = scalar_select %p68, %s67, 0
    %p70 = scmp.eq.s32.totalorder 0, 0
    // Predicated region
    $region10: #{tpu_custom_call.1} parent=1 // pred_check
      %p71 = pneg %p70
    $region11: #{tpu_custom_call.1} parent=1 // pred_check_branch
      %73 = sbr.rel (%p71) target = $region13
    $region12: #{tpu_custom_call.1} parent=1 // pred_region
      %vm74 = vcmask 106496
      %75 = vst.msk [vmem:[#allocation2] sm:$0x1] %vm74, 0.0
      %76 = vst.msk [vmem:[#allocation4] sm:$0x1] %vm74, 0.0
      %77 = vst.msk [vmem:[#allocation6] sm:$0x1] %vm74, 0.0
    $region13: #{tpu_custom_call.1} parent=1 // pred_fallthru
      _
    %v78 = vld [vmem:[%s56] sm:$0xff]
    %v79 = vld [vmem:[%s66] sm:$0xff]
    %vm80 = vcmask 113664
    %v81 = vsel %vm80, %v78, -inf
    %82 = vmax.xlane.f32.xlu0 %v81
    %v83 = vpop.xlane.xlu0 %82
    %v84 = vsub.f32 %v78, %v83
    %v85 = vmul.f32 %v84, 1.442695
    %v86 = vpow.pop %v85
    %v87 = vsel %vm80, %v86, 0.0
    %88 = vadd.xlane.f32.xlu0 %v87
    %v89 = vpop.xlane.xlu0 %88
    %v90 = vrcp.pop %v89
    %v91 = vmul.f32 %v86, %v90
    %v92 = vlaneseq
    %v93 = vand.u32 %v92, 127
    %94 = vset.pattern.permute.xlu0 0
    %95 = vperm.xlu0 %94, %v79
    %v96 = vpop.permute.xlu0 %95
    %vm97 = vcmp.eq.s32.totalorder %v93, %v96
    %v98 = vsel %vm97, 1, 0
    %v99 = vcvt.s32.f32 %v98
    %v100 = vsel %vm97, %v91, 0.0
    %v101 = vsel %vm80, %v100, 0.0
    %v102 = vrot.slane %v101, 4
    %v103 = vadd.f32 %v101, %v102
    %v104 = vrot.slane %v103, 2
    %v105 = vadd.f32 %v103, %v104
    %v106 = vrot.slane %v105, 1
    %v107 = vadd.f32 %v105, %v106
    %v108 = vsel %vm80, %v91, 0.0
    %v109 = vrot.slane %v108, 4
    %v110 = vadd.f32 %v108, %v109
    %v111 = vrot.slane %v110, 2
    %v112 = vadd.f32 %v110, %v111
    %v113 = vrot.slane %v112, 1
    %v114 = vadd.f32 %v112, %v113
    %v115 = vsel %vm80, %v99, 0.0
    %v116 = vrot.slane %v115, 4
    %v117 = vadd.f32 %v115, %v116
    %v118 = vrot.slane %v117, 2
    %v119 = vadd.f32 %v117, %v118
    %v120 = vrot.slane %v119, 1
    %v121 = vadd.f32 %v119, %v120
    %v122 = vld [vmem:[#allocation2] sm:$0x1]
    %v123 = vadd.f32 %v122, %v107
    %vm124 = vcmask 106496
    %125 = vst.msk [vmem:[#allocation2] sm:$0x1] %vm124, %v123
    %v126 = vld [vmem:[#allocation4] sm:$0x1]
    %v127 = vadd.f32 %v126, %v114
    %128 = vst.msk [vmem:[#allocation4] sm:$0x1] %vm124, %v127
    %v129 = vld [vmem:[#allocation6] sm:$0x1]
    %v130 = vadd.f32 %v129, %v121
    %131 = vst.msk [vmem:[#allocation6] sm:$0x1] %vm124, %v130
    // Predicated region
    $region14: #{tpu_custom_call.1} parent=1 // pred_check
      _
    $region15: #{tpu_custom_call.1} parent=1 // pred_check_branch
      %133 = sbr.rel (0) target = $region17
    $region16: #{tpu_custom_call.1} parent=1 // pred_region
      %s135 = ssub.s32 16, 16
      %136 = vsyncadd [#allocation3], %s135
      %s138 = sshll.u32 [#allocation2], 4
      %s139 = int_to_ptr.vmem [resolvable:$true] %s138
      %141 = dma.vmem_to_hbm [thread:$0]  %s139, 16, %s2, [#allocation3]
    $region17: #{tpu_custom_call.1} parent=1 // pred_fallthru
      _
    // Predicated region
    $region18: #{tpu_custom_call.1} parent=1 // pred_check
      _
    $region19: #{tpu_custom_call.1} parent=1 // pred_check_branch
      %143 = sbr.rel (0) target = $region21
    $region20: #{tpu_custom_call.1} parent=1 // pred_region
      %s145 = ssub.s32 16, 16
      %146 = vsyncadd [#allocation5], %s145
      %s148 = sshll.u32 [#allocation4], 4
      %s149 = int_to_ptr.vmem [resolvable:$true] %s148
      %151 = dma.vmem_to_hbm [thread:$0]  %s149, 16, %s3, [#allocation5]
    $region21: #{tpu_custom_call.1} parent=1 // pred_fallthru
      _
    // Predicated region
    $region22: #{tpu_custom_call.1} parent=1 // pred_check
      _
    $region23: #{tpu_custom_call.1} parent=1 // pred_check_branch
      %153 = sbr.rel (0) target = $region25
    $region24: #{tpu_custom_call.1} parent=1 // pred_region
      %s155 = ssub.s32 16, 16
      %156 = vsyncadd [#allocation5], %s155
      %s158 = sshll.u32 [#allocation6], 4
      %s159 = int_to_ptr.vmem [resolvable:$true] %s158
      %161 = dma.vmem_to_hbm [thread:$0]  %s159, 16, %s4, [#allocation5]
    $region25: #{tpu_custom_call.1} parent=1 // pred_fallthru
      _
    // Predicated region
    $region26: #{tpu_custom_call.1} parent=1 // pred_check
      _
    $region27: #{tpu_custom_call.1} parent=1 // pred_check_branch
      %163 = sbr.rel (0) target = $region29
    $region28: #{tpu_custom_call.1} parent=1 // pred_region
      %164 = dma.done [#allocation3], 16
    $region29: #{tpu_custom_call.1} parent=1 // pred_fallthru
      _
    // Predicated region
    $region30: #{tpu_custom_call.1} parent=1 // pred_check
      _
    $region31: #{tpu_custom_call.1} parent=1 // pred_check_branch
      %166 = sbr.rel (0) target = $region33
    $region32: #{tpu_custom_call.1} parent=1 // pred_region
      %167 = dma.done [#allocation5], 16
    $region33: #{tpu_custom_call.1} parent=1 // pred_fallthru
      _
    // Predicated region
    $region34: #{tpu_custom_call.1} parent=1 // pred_check
      _
    $region35: #{tpu_custom_call.1} parent=1 // pred_check_branch
      %169 = sbr.rel (0) target = $region37
    $region36: #{tpu_custom_call.1} parent=1 // pred_region
      %170 = dma.done [#allocation5], 16
    $region37: #{tpu_custom_call.1} parent=1 // pred_fallthru
      _
    %171 = vsyncpa [#allocation3], 1
    %172 = vsyncpa [#allocation5], 1

</llo_original>
